<compile_context>
chip_gen: v7x
topology: tpu7x:2x2x1
jax: 0.10.0
libtpu: 0.0.40
codegen_flags: <defaults>
</compile_context>

<pallas_src>
import jax
import jax.numpy as jnp
from jax.experimental import pallas as pl
from jax.experimental.pallas import tpu as pltpu

LANE = 128            # vreg lane width
DEFAULT_TILE_B = 1024  # large batch tile: kernel is x-DMA/overhead bound
VMEM_TILE_BUDGET = 24 << 20  # budget for the per-tile (x/out/activation) buffers


def _round_up(x, m):
    return (x + m - 1) // m * m


# ----------------------------- kernel ----------------------------------------

def mlp_deep_kernel(x_ref,
                    w1_ref, b1_ref,
                    w2_ref, b2_ref,
                    w3_ref, b3_ref,
                    w4_ref, b4_ref,
                    out_ref):
    # fc1 + relu  (bf16 MXU operands, f32 accumulate, f32 elementwise)
    h = jnp.dot(x_ref[...], w1_ref[...], preferred_element_type=jnp.float32)
    h = jnp.maximum(h + b1_ref[...], 0.0)
    # fc2 + relu
    h = jnp.dot(h.astype(jnp.bfloat16), w2_ref[...],
                preferred_element_type=jnp.float32)
    h = jnp.maximum(h + b2_ref[...], 0.0)
    # fc3 + relu
    h = jnp.dot(h.astype(jnp.bfloat16), w3_ref[...],
                preferred_element_type=jnp.float32)
    h = jnp.maximum(h + b3_ref[...], 0.0)
    # fc4 (logits, no activation)
    h = jnp.dot(h.astype(jnp.bfloat16), w4_ref[...],
                preferred_element_type=jnp.float32) + b4_ref[...]
    out_ref[...] = h.astype(out_ref.dtype)


# ----------------------------- wrapper ----------------------------------------

def _pick_tile_b(requested, b, k_p, nc_p, h_max):
    """Multiple-of-8 batch tile that fits the VMEM budget and keeps >=2 grid
    steps for large batches (megacore + pipelining)."""
    b8 = _round_up(b, 8)
    t = _round_up(max(8, min(requested, b8)), 8)

    def tile_bytes(t):
        return (2 * t * k_p * 2       # x double-buffer (bf16)
                + 2 * t * nc_p * 4    # out double-buffer (f32)
                + 3 * t * h_max * 4)  # activation headroom (f32)

    while t > 8 and tile_bytes(t) > VMEM_TILE_BUDGET:
        t = max(8, _round_up(t // 2, 8))

    # keep the grid >= 2 steps when the batch allows it (never below 128 rows)
    if b8 >= 2 * LANE and pl.cdiv(b8, t) < 2:
        t = _round_up(pl.cdiv(b8, 2), 8)
    return t


def mlp_classifier_deep(x, params, *, tile_b=DEFAULT_TILE_B):
    """x: (b, 3, H, W) float32. Returns (b, num_classes) float32 logits."""
    b = x.shape[0]
    x_flat = x.reshape(b, -1)                     # same order as torch .view(b, -1)
    in_dim = x_flat.shape[1]
    (w1, b1), (w2, b2), (w3, b3), (w4, b4) = params
    num_classes = w4.shape[1]

    # ---- lane-pad every feature dimension to a multiple of 128 -------------
    k_p  = _round_up(in_dim, LANE)
    h1_p = _round_up(w1.shape[1], LANE)
    h2_p = _round_up(w2.shape[1], LANE)
    h3_p = _round_up(w3.shape[1], LANE)
    nc_p = _round_up(num_classes, LANE)
    h_max = max(h1_p, h2_p, h3_p, nc_p)

    def pad2(a, rows, cols):
        if a.shape == (rows, cols):
            return a
        return jnp.pad(a, ((0, rows - a.shape[0]), (0, cols - a.shape[1])))

    # weights stored (in_dim, out_dim) (transposed vs torch); bf16 on the host
    # so their (one-time) HBM->VMEM DMA is half-size.
    w1p = pad2(w1, k_p,  h1_p).astype(jnp.bfloat16)
    w2p = pad2(w2, h1_p, h2_p).astype(jnp.bfloat16)
    w3p = pad2(w3, h2_p, h3_p).astype(jnp.bfloat16)
    w4p = pad2(w4, h3_p, nc_p).astype(jnp.bfloat16)
    b1p = pad2(b1, 1, h1_p)
    b2p = pad2(b2, 1, h2_p)
    b3p = pad2(b3, 1, h3_p)
    b4p = pad2(b4, 1, nc_p)

    # ---- batch tiling -------------------------------------------------------
    tile_b = _pick_tile_b(tile_b, b, k_p, nc_p, h_max)
    b_pad = _round_up(b, tile_b)

    # x: cast to bf16 once (halves the dominant per-tile DMA); pad only if the
    # shape actually needs it (no-op jnp.pad when b and in_dim are aligned).
    x_bf = x_flat.astype(jnp.bfloat16)
    if (b_pad, k_p) != x_bf.shape:
        x_bf = jnp.pad(x_bf, ((0, b_pad - b), (0, k_p - in_dim)))

    grid = (b_pad // tile_b,)
    resident = lambda i: (0, 0)                   # weights/biases pinned in VMEM

    # ---- VMEM limit from actual buffer sizes --------------------------------
    weight_bytes = 2 * 2 * (k_p * h1_p + h1_p * h2_p + h2_p * h3_p + h3_p * nc_p)
    bias_bytes   = 2 * 4 * (h1_p + h2_p + h3_p + nc_p)
    tile_bytes   = (2 * tile_b * k_p * 2 + 2 * tile_b * nc_p * 4
                    + 3 * tile_b * h_max * 4)
    vmem_limit = min(int((weight_bytes + bias_bytes + tile_bytes) * 1.5)
                     + (2 << 20), 64 << 20)

    out = pl.pallas_call(
        mlp_deep_kernel,
        out_shape=jax.ShapeDtypeStruct((b_pad, nc_p), jnp.float32),
        grid_spec=pltpu.PrefetchScalarGridSpec(
            num_scalar_prefetch=0,
            grid=grid,
            in_specs=[
                pl.BlockSpec((tile_b, k_p), lambda i: (i, 0)),   # x tile (pipelined)
                pl.BlockSpec((k_p,  h1_p), resident),
                pl.BlockSpec((1,    h1_p), resident),
                pl.BlockSpec((h1_p, h2_p), resident),
                pl.BlockSpec((1,    h2_p), resident),
                pl.BlockSpec((h2_p, h3_p), resident),
                pl.BlockSpec((1,    h3_p), resident),
                pl.BlockSpec((h3_p, nc_p), resident),
                pl.BlockSpec((1,    nc_p), resident),
            ],
            out_specs=pl.BlockSpec((tile_b, nc_p), lambda i: (i, 0)),
        ),
        compiler_params=pltpu.CompilerParams(
            dimension_semantics=("parallel",),     # megacore sharding on v7x
            vmem_limit_bytes=vmem_limit,
        ),
    )(x_bf, w1p, b1p, w2p, b2p, w3p, b3p, w4p, b4p)

    return out[:b, :num_classes]


# -------------------------- init & reference ---------------------------------

def init_linear(key, in_dim, out_dim):
    """PyTorch nn.Linear default init: U(-1/sqrt(in), 1/sqrt(in)).
    Weight returned as (in_dim, out_dim); bias as (1, out_dim)."""
    kw, kb = jax.random.split(key)
    bound = 1.0 / (in_dim ** 0.5)
    w = jax.random.uniform(kw, (in_dim, out_dim), jnp.float32, -bound, bound)
    bias = jax.random.uniform(kb, (1, out_dim), jnp.float32, -bound, bound)
    return w, bias


def init_params(key, h, w, num_classes=6, h1=128, h2=64, h3=32):
    in_dim = 3 * h * w
    keys = jax.random.split(key, 4)
    return (
        init_linear(keys[0], in_dim, h1),
        init_linear(keys[1], h1, h2),
        init_linear(keys[2], h2, h3),
        init_linear(keys[3], h3, num_classes),
    )


def reference_forward(x, params):
    """Plain-JAX f32 reference for correctness checking."""
    b = x.shape[0]
    h = x.reshape(b, -1)
    (w1, b1), (w2, b2), (w3, b3), (w4, b4) = params
    h = jnp.maximum(h @ w1 + b1, 0.0)
    h = jnp.maximum(h @ w2 + b2, 0.0)
    h = jnp.maximum(h @ w3 + b3, 0.0)
    return h @ w4 + b4


if __name__ == "__main__":
    # Small shapes consistent with the module: batch=2, 3-channel 16x16 images.
    B, H, W = 2, 16, 16
    NUM_CLASSES = 6

    key = jax.random.PRNGKey(0)
    k_x, k_p = jax.random.split(key)
    x = jax.random.normal(k_x, (B, 3, H, W), jnp.float32)
    params = init_params(k_p, H, W, NUM_CLASSES)

    out = mlp_classifier_deep(x, params)
    out = jax.block_until_ready(out)

    ref = reference_forward(x, params)
    assert out.shape == (B, NUM_CLASSES), out.shape
    # bf16 MXU operands with f32 accumulation -> loose-but-safe tolerance vs f32 ref.
    assert jnp.allclose(out, ref, atol=2e-2, rtol=2e-2), "mismatch vs reference"

    print("KERNEL_OK")
</pallas_src>

<mosaic_0001>
module attributes {stable_mosaic.version = 11 : i64} {
  func.func @mlp_deep_kernel(%arg0: i32, %arg1: memref<8x768xbf16, #tpu.memory_space<vmem>>, %arg2: memref<768x128xbf16, #tpu.memory_space<vmem>>, %arg3: memref<1x128xf32, #tpu.memory_space<vmem>>, %arg4: memref<128x128xbf16, #tpu.memory_space<vmem>>, %arg5: memref<1x128xf32, #tpu.memory_space<vmem>>, %arg6: memref<128x128xbf16, #tpu.memory_space<vmem>>, %arg7: memref<1x128xf32, #tpu.memory_space<vmem>>, %arg8: memref<128x128xbf16, #tpu.memory_space<vmem>>, %arg9: memref<1x128xf32, #tpu.memory_space<vmem>>, %arg10: memref<8x128xf32, #tpu.memory_space<vmem>>) attributes {dimension_semantics = [#tpu.dimension_semantics<parallel>], iteration_bounds = array<i64: 1>, scalar_prefetch = 0 : i64, scratch_operands = 0 : i64, tpu.core_type = #tpu.core_type<tc>, window_params = [{transform_indices = @transform_0, window_bounds = array<i64: 8, 768>}, {pipeline_mode = #tpu.pipeline_mode<synchronous>, transform_indices = @transform_1, window_bounds = array<i64: 768, 128>}, {pipeline_mode = #tpu.pipeline_mode<synchronous>, transform_indices = @transform_2, window_bounds = array<i64: 1, 128>}, {pipeline_mode = #tpu.pipeline_mode<synchronous>, transform_indices = @transform_3, window_bounds = array<i64: 128, 128>}, {pipeline_mode = #tpu.pipeline_mode<synchronous>, transform_indices = @transform_4, window_bounds = array<i64: 1, 128>}, {pipeline_mode = #tpu.pipeline_mode<synchronous>, transform_indices = @transform_5, window_bounds = array<i64: 128, 128>}, {pipeline_mode = #tpu.pipeline_mode<synchronous>, transform_indices = @transform_6, window_bounds = array<i64: 1, 128>}, {pipeline_mode = #tpu.pipeline_mode<synchronous>, transform_indices = @transform_7, window_bounds = array<i64: 128, 128>}, {pipeline_mode = #tpu.pipeline_mode<synchronous>, transform_indices = @transform_8, window_bounds = array<i64: 1, 128>}, {transform_indices = @transform_9, window_bounds = array<i64: 8, 128>}]} {
    %c0 = arith.constant 0 : index
    %c0_0 = arith.constant 0 : index
    %0 = vector.load %arg1[%c0, %c0_0] : memref<8x768xbf16, #tpu.memory_space<vmem>>, vector<8x768xbf16>
    %c0_1 = arith.constant 0 : index
    %c0_2 = arith.constant 0 : index
    %1 = vector.load %arg2[%c0_1, %c0_2] : memref<768x128xbf16, #tpu.memory_space<vmem>>, vector<768x128xbf16>
    %cst = arith.constant dense<0.000000e+00> : vector<8x128xf32>
    %2 = tpu.matmul %0, %1, %cst {dimension_numbers = #tpu.dot_dimension_numbers<[1], [0], [0], [1], [0, 0, 1, 1], [], []>} : vector<8x768xbf16>, vector<768x128xbf16>, vector<8x128xf32> -> vector<8x128xf32>
    %c0_3 = arith.constant 0 : index
    %c0_4 = arith.constant 0 : index
    %3 = vector.load %arg3[%c0_3, %c0_4] : memref<1x128xf32, #tpu.memory_space<vmem>>, vector<1x128xf32>
    %4 = vector.broadcast %3 : vector<1x128xf32> to vector<8x128xf32>
    %5 = arith.addf %2, %4 : vector<8x128xf32>
    %cst_5 = arith.constant 0.000000e+00 : f32
    %6 = vector.broadcast %cst_5 : f32 to vector<8x128xf32>
    %7 = arith.maximumf %5, %6 : vector<8x128xf32>
    %8 = arith.truncf %7 : vector<8x128xf32> to vector<8x128xbf16>
    %c0_6 = arith.constant 0 : index
    %c0_7 = arith.constant 0 : index
    %9 = vector.load %arg4[%c0_6, %c0_7] : memref<128x128xbf16, #tpu.memory_space<vmem>>, vector<128x128xbf16>
    %cst_8 = arith.constant dense<0.000000e+00> : vector<8x128xf32>
    %10 = tpu.matmul %8, %9, %cst_8 {dimension_numbers = #tpu.dot_dimension_numbers<[1], [0], [0], [1], [0, 0, 1, 1], [], []>} : vector<8x128xbf16>, vector<128x128xbf16>, vector<8x128xf32> -> vector<8x128xf32>
    %c0_9 = arith.constant 0 : index
    %c0_10 = arith.constant 0 : index
    %11 = vector.load %arg5[%c0_9, %c0_10] : memref<1x128xf32, #tpu.memory_space<vmem>>, vector<1x128xf32>
    %12 = vector.broadcast %11 : vector<1x128xf32> to vector<8x128xf32>
    %13 = arith.addf %10, %12 : vector<8x128xf32>
    %cst_11 = arith.constant 0.000000e+00 : f32
    %14 = vector.broadcast %cst_11 : f32 to vector<8x128xf32>
    %15 = arith.maximumf %13, %14 : vector<8x128xf32>
    %16 = arith.truncf %15 : vector<8x128xf32> to vector<8x128xbf16>
    %c0_12 = arith.constant 0 : index
    %c0_13 = arith.constant 0 : index
    %17 = vector.load %arg6[%c0_12, %c0_13] : memref<128x128xbf16, #tpu.memory_space<vmem>>, vector<128x128xbf16>
    %cst_14 = arith.constant dense<0.000000e+00> : vector<8x128xf32>
    %18 = tpu.matmul %16, %17, %cst_14 {dimension_numbers = #tpu.dot_dimension_numbers<[1], [0], [0], [1], [0, 0, 1, 1], [], []>} : vector<8x128xbf16>, vector<128x128xbf16>, vector<8x128xf32> -> vector<8x128xf32>
    %c0_15 = arith.constant 0 : index
    %c0_16 = arith.constant 0 : index
    %19 = vector.load %arg7[%c0_15, %c0_16] : memref<1x128xf32, #tpu.memory_space<vmem>>, vector<1x128xf32>
    %20 = vector.broadcast %19 : vector<1x128xf32> to vector<8x128xf32>
    %21 = arith.addf %18, %20 : vector<8x128xf32>
    %cst_17 = arith.constant 0.000000e+00 : f32
    %22 = vector.broadcast %cst_17 : f32 to vector<8x128xf32>
    %23 = arith.maximumf %21, %22 : vector<8x128xf32>
    %24 = arith.truncf %23 : vector<8x128xf32> to vector<8x128xbf16>
    %c0_18 = arith.constant 0 : index
    %c0_19 = arith.constant 0 : index
    %25 = vector.load %arg8[%c0_18, %c0_19] : memref<128x128xbf16, #tpu.memory_space<vmem>>, vector<128x128xbf16>
    %cst_20 = arith.constant dense<0.000000e+00> : vector<8x128xf32>
    %26 = tpu.matmul %24, %25, %cst_20 {dimension_numbers = #tpu.dot_dimension_numbers<[1], [0], [0], [1], [0, 0, 1, 1], [], []>} : vector<8x128xbf16>, vector<128x128xbf16>, vector<8x128xf32> -> vector<8x128xf32>
    %c0_21 = arith.constant 0 : index
    %c0_22 = arith.constant 0 : index
    %27 = vector.load %arg9[%c0_21, %c0_22] : memref<1x128xf32, #tpu.memory_space<vmem>>, vector<1x128xf32>
    %28 = vector.broadcast %27 : vector<1x128xf32> to vector<8x128xf32>
    %29 = arith.addf %26, %28 : vector<8x128xf32>
    %c0_23 = arith.constant 0 : index
    %c0_24 = arith.constant 0 : index
    %30 = vector.load %arg10[%c0_23, %c0_24] : memref<8x128xf32, #tpu.memory_space<vmem>>, vector<8x128xf32>
    tpu.vector_store %arg10[%c0_23, %c0_24], %29 {strides = array<i32>} : memref<8x128xf32, #tpu.memory_space<vmem>>, vector<8x128xf32>,
    return
  }
  func.func @transform_0(%arg0: i32) -> (i32, i32) {
    %c0_i32 = arith.constant 0 : i32
    %c0_i32_0 = arith.constant 0 : i32
    return %arg0, %c0_i32 : i32, i32
  }
  func.func @transform_1(%arg0: i32) -> (i32, i32) {
    %c0_i32 = arith.constant 0 : i32
    %c0_i32_0 = arith.constant 0 : i32
    %c0_i32_1 = arith.constant 0 : i32
    return %c0_i32, %c0_i32_0 : i32, i32
  }
  func.func @transform_2(%arg0: i32) -> (i32, i32) {
    %c0_i32 = arith.constant 0 : i32
    %c0_i32_0 = arith.constant 0 : i32
    %c0_i32_1 = arith.constant 0 : i32
    return %c0_i32, %c0_i32_0 : i32, i32
  }
  func.func @transform_3(%arg0: i32) -> (i32, i32) {
    %c0_i32 = arith.constant 0 : i32
    %c0_i32_0 = arith.constant 0 : i32
    %c0_i32_1 = arith.constant 0 : i32
    return %c0_i32, %c0_i32_0 : i32, i32
  }
  func.func @transform_4(%arg0: i32) -> (i32, i32) {
    %c0_i32 = arith.constant 0 : i32
    %c0_i32_0 = arith.constant 0 : i32
    %c0_i32_1 = arith.constant 0 : i32
    return %c0_i32, %c0_i32_0 : i32, i32
  }
  func.func @transform_5(%arg0: i32) -> (i32, i32) {
    %c0_i32 = arith.constant 0 : i32
    %c0_i32_0 = arith.constant 0 : i32
    %c0_i32_1 = arith.constant 0 : i32
    return %c0_i32, %c0_i32_0 : i32, i32
  }
  func.func @transform_6(%arg0: i32) -> (i32, i32) {
    %c0_i32 = arith.constant 0 : i32
    %c0_i32_0 = arith.constant 0 : i32
    %c0_i32_1 = arith.constant 0 : i32
    return %c0_i32, %c0_i32_0 : i32, i32
  }
  func.func @transform_7(%arg0: i32) -> (i32, i32) {
    %c0_i32 = arith.constant 0 : i32
    %c0_i32_0 = arith.constant 0 : i32
    %c0_i32_1 = arith.constant 0 : i32
    return %c0_i32, %c0_i32_0 : i32, i32
  }
  func.func @transform_8(%arg0: i32) -> (i32, i32) {
    %c0_i32 = arith.constant 0 : i32
    %c0_i32_0 = arith.constant 0 : i32
    %c0_i32_1 = arith.constant 0 : i32
    return %c0_i32, %c0_i32_0 : i32, i32
  }
  func.func @transform_9(%arg0: i32) -> (i32, i32) {
    %c0_i32 = arith.constant 0 : i32
    %c0_i32_0 = arith.constant 0 : i32
    return %arg0, %c0_i32 : i32, i32
  }
}

</mosaic_0001>

<llo_original>
// kernel: tpu_custom_call.1
$region0: #{tpu_custom_call.1}
  #allocation0 [shape = 'u32[]', space=smem, size = 0x4, offset = 0x4, fixed_abs, tag = 'smem constant byte address 0x4 - core index']
  #allocation1 [shape = 'u32[144,128]{1,0:T(1,128)}', space=vmem, size = 0x12000, scoped, tag = 'internal scratch']
  %s0 = inlined_call_operand.hbm [shape: bf16[8,768], index: 0, kind: input, shape index: {}]
  %s1 = inlined_call_operand.hbm [shape: bf16[768,128], index: 1, kind: input, shape index: {}]
  %s2 = inlined_call_operand.vmem [shape: f32[1,128], index: 2, kind: input, shape index: {}]
  %s3 = inlined_call_operand.hbm [shape: bf16[128,128], index: 3, kind: input, shape index: {}]
  %s4 = inlined_call_operand.vmem [shape: f32[1,128], index: 4, kind: input, shape index: {}]
  %s5 = inlined_call_operand.hbm [shape: bf16[128,128], index: 5, kind: input, shape index: {}]
  %s6 = inlined_call_operand.vmem [shape: f32[1,128], index: 6, kind: input, shape index: {}]
  %s7 = inlined_call_operand.hbm [shape: bf16[128,128], index: 7, kind: input, shape index: {}]
  %s8 = inlined_call_operand.vmem [shape: f32[1,128], index: 8, kind: input, shape index: {}]
  %s9 = inlined_call_operand.hbm [shape: f32[8,128], index: 9, kind: output, shape index: {}]
  %s10 = sld [smem:[#allocation0]]
  $region66: #{tpu_custom_call.1} parent=0
    _
  %s12 = ssub.s32 1, %s10
  %s13 = scalar_select 0, %s12, %s10
  $region1: #{tpu_custom_call.1} parent=0
    #allocation2 [shape = 'u8[12288]{0}', space=vmem, size = 0x3000, scoped, tag = 'input window, operand 0, single buffered']
    #allocation3 [shape = 's32[1]{0}', space=sflag, size = 0x4, scoped, tag = 'scoped memory for tpu_custom_call.1']
    #allocation4 [shape = 's32[1]{0}', space=sflag, size = 0x4, scoped, tag = 'scoped memory for tpu_custom_call.1']
    #allocation5 [shape = 'u8[196608]{0}', space=vmem, size = 0x30000, scoped, tag = 'input window, operand 1, single buffered']
    #allocation6 [shape = 's32[1]{0}', space=sflag, size = 0x4, scoped, tag = 'scoped memory for tpu_custom_call.1']
    #allocation7 [shape = 'u8[32768]{0}', space=vmem, size = 0x8000, scoped, tag = 'input window, operand 3, single buffered']
    #allocation8 [shape = 'u8[32768]{0}', space=vmem, size = 0x8000, scoped, tag = 'input window, operand 5, single buffered']
    #allocation9 [shape = 's32[1]{0}', space=sflag, size = 0x4, scoped, tag = 'scoped memory for tpu_custom_call.1']
    #allocation10 [shape = 'u8[32768]{0}', space=vmem, size = 0x8000, scoped, tag = 'input window, operand 7, single buffered']
    #allocation11 [shape = 'u8[4096]{0}', space=vmem, size = 0x1000, scoped, tag = 'output window, operand 0, single buffered']
    %14 = vsyncpa [#allocation3], 0
    %15 = vsyncpa [#allocation6], 0
    %16 = vsyncpa [#allocation9], 0
    %17 = vsyncpa [#allocation4], 0
    // Predicated region
    $region2: #{tpu_custom_call.1} parent=1 // pred_check
      _
    $region3: #{tpu_custom_call.1} parent=1 // pred_check_branch
      %19 = sbr.rel (0) target = $region5
    $region4: #{tpu_custom_call.1} parent=1 // pred_region
      %s21 = ssub.s32 384, 384
      %22 = vsyncadd [#allocation3], %s21
      %s24 = sshll.u32 [#allocation2], 4
      %s25 = int_to_ptr.vmem [resolvable:$true] %s24
      %27 = dma.hbm_to_vmem [thread:$0]  %s0, 384, %s25, [#allocation3]
    $region5: #{tpu_custom_call.1} parent=1 // pred_fallthru
      _
    // Predicated region
    $region6: #{tpu_custom_call.1} parent=1 // pred_check
      _
    $region7: #{tpu_custom_call.1} parent=1 // pred_check_branch
      %29 = sbr.rel (0) target = $region9
    $region8: #{tpu_custom_call.1} parent=1 // pred_region
      %s31 = ssub.s32 6144, 6144
      %32 = vsyncadd [#allocation6], %s31
      %s33 = sshll.u32 [#allocation5], 4
      %s34 = int_to_ptr.vmem [resolvable:$true] %s33
      %39 = dma.hbm_to_vmem [thread:$0]  %s1, 6144, %s34, [#allocation6], 64, 64, 4
    $region9: #{tpu_custom_call.1} parent=1 // pred_fallthru
      _
    // Predicated region
    $region10: #{tpu_custom_call.1} parent=1 // pred_check
      _
    $region11: #{tpu_custom_call.1} parent=1 // pred_check_branch
      %41 = sbr.rel (0) target = $region13
    $region12: #{tpu_custom_call.1} parent=1 // pred_region
      _
    $region13: #{tpu_custom_call.1} parent=1 // pred_fallthru
      _
    // Predicated region
    $region14: #{tpu_custom_call.1} parent=1 // pred_check
      _
    $region15: #{tpu_custom_call.1} parent=1 // pred_check_branch
      %43 = sbr.rel (0) target = $region17
    $region16: #{tpu_custom_call.1} parent=1 // pred_region
      %s45 = ssub.s32 1024, 1024
      %46 = vsyncadd [#allocation6], %s45
      %s47 = sshll.u32 [#allocation7], 4
      %s48 = int_to_ptr.vmem [resolvable:$true] %s47
      %53 = dma.hbm_to_vmem [thread:$0]  %s3, 1024, %s48, [#allocation6], 64, 64, 4
    $region17: #{tpu_custom_call.1} parent=1 // pred_fallthru
      _
    // Predicated region
    $region18: #{tpu_custom_call.1} parent=1 // pred_check
      _
    $region19: #{tpu_custom_call.1} parent=1 // pred_check_branch
      %55 = sbr.rel (0) target = $region21
    $region20: #{tpu_custom_call.1} parent=1 // pred_region
      _
    $region21: #{tpu_custom_call.1} parent=1 // pred_fallthru
      _
    // Predicated region
    $region22: #{tpu_custom_call.1} parent=1 // pred_check
      _
    $region23: #{tpu_custom_call.1} parent=1 // pred_check_branch
      %57 = sbr.rel (0) target = $region25
    $region24: #{tpu_custom_call.1} parent=1 // pred_region
      %s59 = ssub.s32 1024, 1024
      %60 = vsyncadd [#allocation9], %s59
      %s61 = sshll.u32 [#allocation8], 4
      %s62 = int_to_ptr.vmem [resolvable:$true] %s61
      %67 = dma.hbm_to_vmem [thread:$0]  %s5, 1024, %s62, [#allocation9], 64, 64, 4
    $region25: #{tpu_custom_call.1} parent=1 // pred_fallthru
      _
    // Predicated region
    $region26: #{tpu_custom_call.1} parent=1 // pred_check
      _
    $region27: #{tpu_custom_call.1} parent=1 // pred_check_branch
      %69 = sbr.rel (0) target = $region29
    $region28: #{tpu_custom_call.1} parent=1 // pred_region
      _
    $region29: #{tpu_custom_call.1} parent=1 // pred_fallthru
      _
    // Predicated region
    $region30: #{tpu_custom_call.1} parent=1 // pred_check
      _
    $region31: #{tpu_custom_call.1} parent=1 // pred_check_branch
      %71 = sbr.rel (0) target = $region33
    $region32: #{tpu_custom_call.1} parent=1 // pred_region
      %s73 = ssub.s32 1024, 1024
      %74 = vsyncadd [#allocation9], %s73
      %s75 = sshll.u32 [#allocation10], 4
      %s76 = int_to_ptr.vmem [resolvable:$true] %s75
      %81 = dma.hbm_to_vmem [thread:$0]  %s7, 1024, %s76, [#allocation9], 64, 64, 4
    $region33: #{tpu_custom_call.1} parent=1 // pred_fallthru
      _
    // Predicated region
    $region34: #{tpu_custom_call.1} parent=1 // pred_check
      _
    $region35: #{tpu_custom_call.1} parent=1 // pred_check_branch
      %83 = sbr.rel (0) target = $region37
    $region36: #{tpu_custom_call.1} parent=1 // pred_region
      _
    $region37: #{tpu_custom_call.1} parent=1 // pred_fallthru
      _
    // Predicated region
    $region38: #{tpu_custom_call.1} parent=1 // pred_check
      _
    $region39: #{tpu_custom_call.1} parent=1 // pred_check_branch
      %85 = sbr.rel (0) target = $region41
    $region40: #{tpu_custom_call.1} parent=1 // pred_region
      %86 = dma.done [#allocation3], 384
    $region41: #{tpu_custom_call.1} parent=1 // pred_fallthru
      _
    // Predicated region
    $region42: #{tpu_custom_call.1} parent=1 // pred_check
      _
    $region43: #{tpu_custom_call.1} parent=1 // pred_check_branch
      %88 = sbr.rel (0) target = $region45
    $region44: #{tpu_custom_call.1} parent=1 // pred_region
      %89 = dma.done [#allocation6], 6144
    $region45: #{tpu_custom_call.1} parent=1 // pred_fallthru
      _
    // Predicated region
    $region46: #{tpu_custom_call.1} parent=1 // pred_check
      _
    $region47: #{tpu_custom_call.1} parent=1 // pred_check_branch
      %91 = sbr.rel (0) target = $region49
    $region48: #{tpu_custom_call.1} parent=1 // pred_region
      %92 = dma.done [#allocation6], 1024
    $region49: #{tpu_custom_call.1} parent=1 // pred_fallthru
      _
    // Predicated region
    $region50: #{tpu_custom_call.1} parent=1 // pred_check
      _
    $region51: #{tpu_custom_call.1} parent=1 // pred_check_branch
      %94 = sbr.rel (0) target = $region53
    $region52: #{tpu_custom_call.1} parent=1 // pred_region
      %95 = dma.done [#allocation9], 1024
    $region53: #{tpu_custom_call.1} parent=1 // pred_fallthru
      _
    // Predicated region
    $region54: #{tpu_custom_call.1} parent=1 // pred_check
      _
    $region55: #{tpu_custom_call.1} parent=1 // pred_check_branch
      %97 = sbr.rel (0) target = $region57
    $region56: #{tpu_custom_call.1} parent=1 // pred_region
      %98 = dma.done [#allocation9], 1024
    $region57: #{tpu_custom_call.1} parent=1 // pred_fallthru
      _
    %v100 = vld [vmem:[#allocation2] sm:$0xff]
    %v101 = vld [vmem:[#allocation2 + $0x8] sm:$0xff]
    %v102 = vld [vmem:[#allocation2 + $0x10] sm:$0xff]
    %v103 = vld [vmem:[#allocation5] sm:$0xf]
    %v104 = vld [vmem:[#allocation5 + $0x4] sm:$0xf]
    %v105 = vld [vmem:[#allocation5 + $0x8] sm:$0xf]
    %v106 = vld [vmem:[#allocation5 + $0xc] sm:$0xf]
    %v107 = vld [vmem:[#allocation5 + $0x10] sm:$0xf]
    %v108 = vld [vmem:[#allocation5 + $0x14] sm:$0xf]
    %v109 = vld [vmem:[#allocation5 + $0x18] sm:$0xf]
    %v110 = vld [vmem:[#allocation5 + $0x1c] sm:$0xf]
    %v111 = vld [vmem:[#allocation5 + $0x20] sm:$0xf]
    %v112 = vld [vmem:[#allocation5 + $0x24] sm:$0xf]
    %v113 = vld [vmem:[#allocation5 + $0x28] sm:$0xf]
    %v114 = vld [vmem:[#allocation5 + $0x2c] sm:$0xf]
    %v115 = vld [vmem:[#allocation5 + $0x30] sm:$0xf]
    %v116 = vld [vmem:[#allocation5 + $0x34] sm:$0xf]
    %v117 = vld [vmem:[#allocation5 + $0x38] sm:$0xf]
    %v118 = vld [vmem:[#allocation5 + $0x3c] sm:$0xf]
    %v119 = vld [vmem:[#allocation5 + $0x40] sm:$0xf]
    %v120 = vld [vmem:[#allocation5 + $0x44] sm:$0xf]
    %v121 = vld [vmem:[#allocation5 + $0x48] sm:$0xf]
    %v122 = vld [vmem:[#allocation5 + $0x4c] sm:$0xf]
    %v123 = vld [vmem:[#allocation5 + $0x50] sm:$0xf]
    %v124 = vld [vmem:[#allocation5 + $0x54] sm:$0xf]
    %v125 = vld [vmem:[#allocation5 + $0x58] sm:$0xf]
    %v126 = vld [vmem:[#allocation5 + $0x5c] sm:$0xf]
    %v127 = vld [vmem:[#allocation5 + $0x60] sm:$0xf]
    %v128 = vld [vmem:[#allocation5 + $0x64] sm:$0xf]
    %v129 = vld [vmem:[#allocation5 + $0x68] sm:$0xf]
    %v130 = vld [vmem:[#allocation5 + $0x6c] sm:$0xf]
    %v131 = vld [vmem:[#allocation5 + $0x70] sm:$0xf]
    %v132 = vld [vmem:[#allocation5 + $0x74] sm:$0xf]
    %v133 = vld [vmem:[#allocation5 + $0x78] sm:$0xf]
    %v134 = vld [vmem:[#allocation5 + $0x7c] sm:$0xf]
    %v135 = vld [vmem:[#allocation5 + $0x80] sm:$0xf]
    %v136 = vld [vmem:[#allocation5 + $0x84] sm:$0xf]
    %v137 = vld [vmem:[#allocation5 + $0x88] sm:$0xf]
    %v138 = vld [vmem:[#allocation5 + $0x8c] sm:$0xf]
    %v139 = vld [vmem:[#allocation5 + $0x90] sm:$0xf]
    %v140 = vld [vmem:[#allocation5 + $0x94] sm:$0xf]
    %v141 = vld [vmem:[#allocation5 + $0x98] sm:$0xf]
    %v142 = vld [vmem:[#allocation5 + $0x9c] sm:$0xf]
    %v143 = vld [vmem:[#allocation5 + $0xa0] sm:$0xf]
    %v144 = vld [vmem:[#allocation5 + $0xa4] sm:$0xf]
    %v145 = vld [vmem:[#allocation5 + $0xa8] sm:$0xf]
    %v146 = vld [vmem:[#allocation5 + $0xac] sm:$0xf]
    %v147 = vld [vmem:[#allocation5 + $0xb0] sm:$0xf]
    %v148 = vld [vmem:[#allocation5 + $0xb4] sm:$0xf]
    %v149 = vld [vmem:[#allocation5 + $0xb8] sm:$0xf]
    %v150 = vld [vmem:[#allocation5 + $0xbc] sm:$0xf]
    %v151 = vld [vmem:[#allocation5 + $0xc0] sm:$0xf]
    %v152 = vld [vmem:[#allocation5 + $0xc4] sm:$0xf]
    %v153 = vld [vmem:[#allocation5 + $0xc8] sm:$0xf]
    %v154 = vld [vmem:[#allocation5 + $0xcc] sm:$0xf]
    %v155 = vld [vmem:[#allocation5 + $0xd0] sm:$0xf]
    %v156 = vld [vmem:[#allocation5 + $0xd4] sm:$0xf]
    %v157 = vld [vmem:[#allocation5 + $0xd8] sm:$0xf]
    %v158 = vld [vmem:[#allocation5 + $0xdc] sm:$0xf]
    %v159 = vld [vmem:[#allocation5 + $0xe0] sm:$0xf]
    %v160 = vld [vmem:[#allocation5 + $0xe4] sm:$0xf]
    %v161 = vld [vmem:[#allocation5 + $0xe8] sm:$0xf]
    %v162 = vld [vmem:[#allocation5 + $0xec] sm:$0xf]
    %v163 = vld [vmem:[#allocation5 + $0xf0] sm:$0xf]
    %v164 = vld [vmem:[#allocation5 + $0xf4] sm:$0xf]
    %v165 = vld [vmem:[#allocation5 + $0xf8] sm:$0xf]
    %v166 = vld [vmem:[#allocation5 + $0xfc] sm:$0xf]
    %v167 = vld [vmem:[#allocation5 + $0x100] sm:$0xf]
    %v168 = vld [vmem:[#allocation5 + $0x104] sm:$0xf]
    %v169 = vld [vmem:[#allocation5 + $0x108] sm:$0xf]
    %v170 = vld [vmem:[#allocation5 + $0x10c] sm:$0xf]
    %v171 = vld [vmem:[#allocation5 + $0x110] sm:$0xf]
    %v172 = vld [vmem:[#allocation5 + $0x114] sm:$0xf]
    %v173 = vld [vmem:[#allocation5 + $0x118] sm:$0xf]
    %v174 = vld [vmem:[#allocation5 + $0x11c] sm:$0xf]
    %v175 = vld [vmem:[#allocation5 + $0x120] sm:$0xf]
    %v176 = vld [vmem:[#allocation5 + $0x124] sm:$0xf]
    %v177 = vld [vmem:[#allocation5 + $0x128] sm:$0xf]
    %v178 = vld [vmem:[#allocation5 + $0x12c] sm:$0xf]
    %v179 = vld [vmem:[#allocation5 + $0x130] sm:$0xf]
    %v180 = vld [vmem:[#allocation5 + $0x134] sm:$0xf]
    %v181 = vld [vmem:[#allocation5 + $0x138] sm:$0xf]
    %v182 = vld [vmem:[#allocation5 + $0x13c] sm:$0xf]
    %v183 = vld [vmem:[#allocation5 + $0x140] sm:$0xf]
    %v184 = vld [vmem:[#allocation5 + $0x144] sm:$0xf]
    %v185 = vld [vmem:[#allocation5 + $0x148] sm:$0xf]
    %v186 = vld [vmem:[#allocation5 + $0x14c] sm:$0xf]
    %v187 = vld [vmem:[#allocation5 + $0x150] sm:$0xf]
    %v188 = vld [vmem:[#allocation5 + $0x154] sm:$0xf]
    %v189 = vld [vmem:[#allocation5 + $0x158] sm:$0xf]
    %v190 = vld [vmem:[#allocation5 + $0x15c] sm:$0xf]
    %v191 = vld [vmem:[#allocation5 + $0x160] sm:$0xf]
    %v192 = vld [vmem:[#allocation5 + $0x164] sm:$0xf]
    %v193 = vld [vmem:[#allocation5 + $0x168] sm:$0xf]
    %v194 = vld [vmem:[#allocation5 + $0x16c] sm:$0xf]
    %v195 = vld [vmem:[#allocation5 + $0x170] sm:$0xf]
    %v196 = vld [vmem:[#allocation5 + $0x174] sm:$0xf]
    %v197 = vld [vmem:[#allocation5 + $0x178] sm:$0xf]
    %v198 = vld [vmem:[#allocation5 + $0x17c] sm:$0xf]
    %v199 = vld [vmem:[%s2] sm:$0x1]
    %v201 = vlaneseq
    %v202 = vshrl.u32 %v201, 7
    %v203 = vsub.s32 0, %v202
    %v204 = vrot.slane %v199, %v203
    %v209 = vunpack.c.l.b16 %v100
    %v210 = vunpack.c.h.b16 %v100
    %v211 = vunpack.c.l.b16 %v101
    %v212 = vunpack.c.h.b16 %v101
    %v213 = vunpack.c.l.b16 %v102
    %v214 = vunpack.c.h.b16 %v102
    %v215 = vpack.c.b16 %v209, %v209
    %v216 = vpack.c.b16 %v210, %v210
    %v217 = vpack.c.b16 %v211, %v211
    %v218 = vpack.c.b16 %v212, %v212
    %v219 = vpack.c.b16 %v213, %v213
    %v220 = vpack.c.b16 %v214, %v214
    %v323 = vunpack.c.l.b16 %v103
    %v324 = vunpack.c.l.b16 %v104
    %v325 = vunpack.c.l.b16 %v105
    %v326 = vunpack.c.l.b16 %v106
    %v327 = vunpack.c.l.b16 %v107
    %v328 = vunpack.c.l.b16 %v108
    %v329 = vunpack.c.l.b16 %v109
    %v330 = vunpack.c.l.b16 %v110
    %v331 = vunpack.c.l.b16 %v111
    %v332 = vunpack.c.l.b16 %v112
    %v333 = vunpack.c.l.b16 %v113
    %v334 = vunpack.c.l.b16 %v114
    %v335 = vunpack.c.l.b16 %v115
    %v336 = vunpack.c.l.b16 %v116
    %v337 = vunpack.c.l.b16 %v117
    %v338 = vunpack.c.l.b16 %v118
    %v339 = vunpack.c.l.b16 %v119
    %v340 = vunpack.c.l.b16 %v120
    %v341 = vunpack.c.l.b16 %v121
    %v342 = vunpack.c.l.b16 %v122
    %v343 = vunpack.c.l.b16 %v123
    %v344 = vunpack.c.l.b16 %v124
    %v345 = vunpack.c.l.b16 %v125
    %v346 = vunpack.c.l.b16 %v126
    %v347 = vunpack.c.l.b16 %v127
    %v348 = vunpack.c.l.b16 %v128
    %v349 = vunpack.c.l.b16 %v129
    %v350 = vunpack.c.l.b16 %v130
    %v351 = vunpack.c.l.b16 %v131
    %v352 = vunpack.c.l.b16 %v132
    %v353 = vunpack.c.l.b16 %v133
    %v354 = vunpack.c.l.b16 %v134
    %v355 = vunpack.c.l.b16 %v135
    %v356 = vunpack.c.l.b16 %v136
    %v357 = vunpack.c.l.b16 %v137
    %v358 = vunpack.c.l.b16 %v138
    %v359 = vunpack.c.l.b16 %v139
    %v360 = vunpack.c.l.b16 %v140
    %v361 = vunpack.c.l.b16 %v141
    %v362 = vunpack.c.l.b16 %v142
    %v363 = vunpack.c.l.b16 %v143
    %v364 = vunpack.c.l.b16 %v144
    %v365 = vunpack.c.l.b16 %v145
    %v366 = vunpack.c.l.b16 %v146
    %v367 = vunpack.c.l.b16 %v147
    %v368 = vunpack.c.l.b16 %v148
    %v369 = vunpack.c.l.b16 %v149
    %v370 = vunpack.c.l.b16 %v150
    %v371 = vunpack.c.l.b16 %v151
    %v372 = vunpack.c.l.b16 %v152
    %v373 = vunpack.c.l.b16 %v153
    %v374 = vunpack.c.l.b16 %v154
    %v375 = vunpack.c.l.b16 %v155
    %v376 = vunpack.c.l.b16 %v156
    %v377 = vunpack.c.l.b16 %v157
    %v378 = vunpack.c.l.b16 %v158
    %v379 = vunpack.c.l.b16 %v159
    %v380 = vunpack.c.l.b16 %v160
    %v381 = vunpack.c.l.b16 %v161
    %v382 = vunpack.c.l.b16 %v162
    %v383 = vunpack.c.l.b16 %v163
    %v384 = vunpack.c.l.b16 %v164
    %v385 = vunpack.c.l.b16 %v165
    %v386 = vunpack.c.l.b16 %v166
    %v387 = vunpack.c.l.b16 %v167
    %v388 = vunpack.c.l.b16 %v168
    %v389 = vunpack.c.l.b16 %v169
    %v390 = vunpack.c.l.b16 %v170
    %v391 = vunpack.c.l.b16 %v171
    %v392 = vunpack.c.l.b16 %v172
    %v393 = vunpack.c.l.b16 %v173
    %v394 = vunpack.c.l.b16 %v174
    %v395 = vunpack.c.l.b16 %v175
    %v396 = vunpack.c.l.b16 %v176
    %v397 = vunpack.c.l.b16 %v177
    %v398 = vunpack.c.l.b16 %v178
    %v399 = vunpack.c.l.b16 %v179
    %v400 = vunpack.c.l.b16 %v180
    %v401 = vunpack.c.l.b16 %v181
    %v402 = vunpack.c.l.b16 %v182
    %v403 = vunpack.c.l.b16 %v183
    %v404 = vunpack.c.l.b16 %v184
    %v405 = vunpack.c.l.b16 %v185
    %v406 = vunpack.c.l.b16 %v186
    %v407 = vunpack.c.l.b16 %v187
    %v408 = vunpack.c.l.b16 %v188
    %v409 = vunpack.c.l.b16 %v189
    %v410 = vunpack.c.l.b16 %v190
    %v411 = vunpack.c.l.b16 %v191
    %v412 = vunpack.c.l.b16 %v192
    %v413 = vunpack.c.l.b16 %v193
    %v414 = vunpack.c.l.b16 %v194
    %v415 = vunpack.c.l.b16 %v195
    %v416 = vunpack.c.l.b16 %v196
    %v417 = vunpack.c.l.b16 %v197
    %v418 = vunpack.c.l.b16 %v198
    %v419 = vpack.c.b16 %v324, %v323
    %v420 = vpack.c.b16 %v326, %v325
    %v421 = vpack.c.b16 %v328, %v327
    %v422 = vpack.c.b16 %v330, %v329
    %v423 = vpack.c.b16 %v332, %v331
    %v424 = vpack.c.b16 %v334, %v333
    %v425 = vpack.c.b16 %v336, %v335
    %v426 = vpack.c.b16 %v338, %v337
    %v427 = vpack.c.b16 %v340, %v339
    %v428 = vpack.c.b16 %v342, %v341
    %v429 = vpack.c.b16 %v344, %v343
    %v430 = vpack.c.b16 %v346, %v345
    %v431 = vpack.c.b16 %v348, %v347
    %v432 = vpack.c.b16 %v350, %v349
    %v433 = vpack.c.b16 %v352, %v351
    %v434 = vpack.c.b16 %v354, %v353
    %v435 = vpack.c.b16 %v356, %v355
    %v436 = vpack.c.b16 %v358, %v357
    %v437 = vpack.c.b16 %v360, %v359
    %v438 = vpack.c.b16 %v362, %v361
    %v439 = vpack.c.b16 %v364, %v363
    %v440 = vpack.c.b16 %v366, %v365
    %v441 = vpack.c.b16 %v368, %v367
    %v442 = vpack.c.b16 %v370, %v369
    %v443 = vpack.c.b16 %v372, %v371
    %v444 = vpack.c.b16 %v374, %v373
    %v445 = vpack.c.b16 %v376, %v375
    %v446 = vpack.c.b16 %v378, %v377
    %v447 = vpack.c.b16 %v380, %v379
    %v448 = vpack.c.b16 %v382, %v381
    %v449 = vpack.c.b16 %v384, %v383
    %v450 = vpack.c.b16 %v386, %v385
    %v451 = vpack.c.b16 %v388, %v387
    %v452 = vpack.c.b16 %v390, %v389
    %v453 = vpack.c.b16 %v392, %v391
    %v454 = vpack.c.b16 %v394, %v393
    %v455 = vpack.c.b16 %v396, %v395
    %v456 = vpack.c.b16 %v398, %v397
    %v457 = vpack.c.b16 %v400, %v399
    %v458 = vpack.c.b16 %v402, %v401
    %v459 = vpack.c.b16 %v404, %v403
    %v460 = vpack.c.b16 %v406, %v405
    %v461 = vpack.c.b16 %v408, %v407
    %v462 = vpack.c.b16 %v410, %v409
    %v463 = vpack.c.b16 %v412, %v411
    %v464 = vpack.c.b16 %v414, %v413
    %v465 = vpack.c.b16 %v416, %v415
    %v466 = vpack.c.b16 %v418, %v417
    %515 = vmatprep.subr.bf16.mxu0 0
    %516 = vmatpush1.bf16.msra.mxu0 %v419
    %517 = vmatprep.subr.bf16.mxu0 0
    %518 = vmatpush1.bf16.msra.mxu0 %v420
    %519 = vmatprep.subr.bf16.mxu0 0
    %520 = vmatpush1.bf16.msra.mxu0 %v421
    %521 = vmatprep.subr.bf16.mxu0 0
    %522 = vmatpush1.bf16.msra.mxu0 %v422
    %523 = vmatprep.subr.bf16.mxu0 0
    %524 = vmatpush1.bf16.msra.mxu0 %v423
    %525 = vmatprep.subr.bf16.mxu0 0
    %526 = vmatpush1.bf16.msra.mxu0 %v424
    %527 = vmatprep.subr.bf16.mxu0 0
    %528 = vmatpush1.bf16.msra.mxu0 %v425
    %529 = vmatprep.subr.bf16.mxu0 0
    %530 = vmatpush1.bf16.msra.mxu0 %v426
    %531 = vmatprep.subr.bf16.mxu0 0
    %532 = vmatpush1.bf16.msra.mxu0 %v427
    %533 = vmatprep.subr.bf16.mxu0 0
    %534 = vmatpush1.bf16.msra.mxu0 %v428
    %535 = vmatprep.subr.bf16.mxu0 0
    %536 = vmatpush1.bf16.msra.mxu0 %v429
    %537 = vmatprep.subr.bf16.mxu0 0
    %538 = vmatpush1.bf16.msra.mxu0 %v430
    %539 = vmatprep.subr.bf16.mxu0 0
    %540 = vmatpush1.bf16.msra.mxu0 %v431
    %541 = vmatprep.subr.bf16.mxu0 0
    %542 = vmatpush1.bf16.msra.mxu0 %v432
    %543 = vmatprep.subr.bf16.mxu0 0
    %544 = vmatpush1.bf16.msra.mxu0 %v433
    %545 = vmatprep.subr.bf16.mxu0 0
    %546 = vmatpush1.bf16.msra.mxu0 %v434
    %547 = vmatprep.mubr.bf16.mxu0 %v216
    %548 = vmatmul.mubr.bf16.gmra.mrb[0].mxu0 %v215
    %v549 = vpop.f32.mrb[0].mxu0
    %v550 = vadd.f32 %v204, %v549
    %v551 = vpop.f32.mrb[0].mxu0
    %v552 = vpop.f32.mrb[0].mxu0
    %v553 = vpop.f32.mrb[0].mxu0
    %554 = vdwg.mxu0
    %555 = vmatprep.subr.bf16.mxu0 0
    %556 = vmatpush1.bf16.msra.mxu0 %v435
    %557 = vmatprep.subr.bf16.mxu0 0
    %558 = vmatpush1.bf16.msra.mxu0 %v436
    %559 = vmatprep.subr.bf16.mxu0 0
    %560 = vmatpush1.bf16.msra.mxu0 %v437
    %561 = vmatprep.subr.bf16.mxu0 0
    %562 = vmatpush1.bf16.msra.mxu0 %v438
    %563 = vmatprep.subr.bf16.mxu0 0
    %564 = vmatpush1.bf16.msra.mxu0 %v439
    %565 = vmatprep.subr.bf16.mxu0 0
    %566 = vmatpush1.bf16.msra.mxu0 %v440
    %567 = vmatprep.subr.bf16.mxu0 0
    %568 = vmatpush1.bf16.msra.mxu0 %v441
    %569 = vmatprep.subr.bf16.mxu0 0
    %570 = vmatpush1.bf16.msra.mxu0 %v442
    %571 = vmatprep.subr.bf16.mxu0 0
    %572 = vmatpush1.bf16.msra.mxu0 %v443
    %573 = vmatprep.subr.bf16.mxu0 0
    %574 = vmatpush1.bf16.msra.mxu0 %v444
    %575 = vmatprep.subr.bf16.mxu0 0
    %576 = vmatpush1.bf16.msra.mxu0 %v445
    %577 = vmatprep.subr.bf16.mxu0 0
    %578 = vmatpush1.bf16.msra.mxu0 %v446
    %579 = vmatprep.subr.bf16.mxu0 0
    %580 = vmatpush1.bf16.msra.mxu0 %v447
    %581 = vmatprep.subr.bf16.mxu0 0
    %582 = vmatpush1.bf16.msra.mxu0 %v448
    %583 = vmatprep.subr.bf16.mxu0 0
    %584 = vmatpush1.bf16.msra.mxu0 %v449
    %585 = vmatprep.subr.bf16.mxu0 0
    %586 = vmatpush1.bf16.msra.mxu0 %v450
    %587 = vmatprep.mubr.bf16.mxu0 %v218
    %588 = vmatmul.mubr.bf16.gmra.mrb[0].mxu0 %v217
    %v589 = vpop.f32.mrb[0].mxu0
    %v590 = vadd.f32 %v550, %v589
    %v591 = vpop.f32.mrb[0].mxu0
    %v592 = vpop.f32.mrb[0].mxu0
    %v593 = vpop.f32.mrb[0].mxu0
    %594 = vdwg.mxu0
    %595 = vmatprep.subr.bf16.mxu0 0
    %596 = vmatpush1.bf16.msra.mxu0 %v451
    %597 = vmatprep.subr.bf16.mxu0 0
    %598 = vmatpush1.bf16.msra.mxu0 %v452
    %599 = vmatprep.subr.bf16.mxu0 0
    %600 = vmatpush1.bf16.msra.mxu0 %v453
    %601 = vmatprep.subr.bf16.mxu0 0
    %602 = vmatpush1.bf16.msra.mxu0 %v454
    %603 = vmatprep.subr.bf16.mxu0 0
    %604 = vmatpush1.bf16.msra.mxu0 %v455
    %605 = vmatprep.subr.bf16.mxu0 0
    %606 = vmatpush1.bf16.msra.mxu0 %v456
    %607 = vmatprep.subr.bf16.mxu0 0
    %608 = vmatpush1.bf16.msra.mxu0 %v457
    %609 = vmatprep.subr.bf16.mxu0 0
    %610 = vmatpush1.bf16.msra.mxu0 %v458
    %611 = vmatprep.subr.bf16.mxu0 0
    %612 = vmatpush1.bf16.msra.mxu0 %v459
    %613 = vmatprep.subr.bf16.mxu0 0
    %614 = vmatpush1.bf16.msra.mxu0 %v460
    %615 = vmatprep.subr.bf16.mxu0 0
    %616 = vmatpush1.bf16.msra.mxu0 %v461
    %617 = vmatprep.subr.bf16.mxu0 0
    %618 = vmatpush1.bf16.msra.mxu0 %v462
    %619 = vmatprep.subr.bf16.mxu0 0
    %620 = vmatpush1.bf16.msra.mxu0 %v463
    %621 = vmatprep.subr.bf16.mxu0 0
    %622 = vmatpush1.bf16.msra.mxu0 %v464
    %623 = vmatprep.subr.bf16.mxu0 0
    %624 = vmatpush1.bf16.msra.mxu0 %v465
    %625 = vmatprep.subr.bf16.mxu0 0
    %626 = vmatpush1.bf16.msra.mxu0 %v466
    %627 = vmatprep.mubr.bf16.mxu0 %v220
    %628 = vmatmul.mubr.bf16.gmra.mrb[0].mxu0 %v219
    %v629 = vpop.f32.mrb[0].mxu0
    %v630 = vadd.f32 %v590, %v629
    %v631 = vpop.f32.mrb[0].mxu0
    %v632 = vpop.f32.mrb[0].mxu0
    %v633 = vpop.f32.mrb[0].mxu0
    %634 = vdwg.mxu0
    %v635 = vmax.f32 %v630, 0.0
    %v636 = vpack.c.bf16 %v635, %v635
    %v637 = vld [vmem:[#allocation7] sm:$0xf]
    %v638 = vld [vmem:[#allocation7 + $0x4] sm:$0xf]
    %v639 = vld [vmem:[#allocation7 + $0x8] sm:$0xf]
    %v640 = vld [vmem:[#allocation7 + $0xc] sm:$0xf]
    %v641 = vld [vmem:[#allocation7 + $0x10] sm:$0xf]
    %v642 = vld [vmem:[#allocation7 + $0x14] sm:$0xf]
    %v643 = vld [vmem:[#allocation7 + $0x18] sm:$0xf]
    %v644 = vld [vmem:[#allocation7 + $0x1c] sm:$0xf]
    %v645 = vld [vmem:[#allocation7 + $0x20] sm:$0xf]
    %v646 = vld [vmem:[#allocation7 + $0x24] sm:$0xf]
    %v647 = vld [vmem:[#allocation7 + $0x28] sm:$0xf]
    %v648 = vld [vmem:[#allocation7 + $0x2c] sm:$0xf]
    %v649 = vld [vmem:[#allocation7 + $0x30] sm:$0xf]
    %v650 = vld [vmem:[#allocation7 + $0x34] sm:$0xf]
    %v651 = vld [vmem:[#allocation7 + $0x38] sm:$0xf]
    %v652 = vld [vmem:[#allocation7 + $0x3c] sm:$0xf]
    %v653 = vld [vmem:[%s4] sm:$0x1]
    %v655 = vlaneseq
    %v656 = vshrl.u32 %v655, 7
    %v657 = vsub.s32 0, %v656
    %v658 = vrot.slane %v653, %v657
    %v676 = vunpack.c.l.b16 %v637
    %v677 = vunpack.c.l.b16 %v638
    %v678 = vunpack.c.l.b16 %v639
    %v679 = vunpack.c.l.b16 %v640
    %v680 = vunpack.c.l.b16 %v641
    %v681 = vunpack.c.l.b16 %v642
    %v682 = vunpack.c.l.b16 %v643
    %v683 = vunpack.c.l.b16 %v644
    %v684 = vunpack.c.l.b16 %v645
    %v685 = vunpack.c.l.b16 %v646
    %v686 = vunpack.c.l.b16 %v647
    %v687 = vunpack.c.l.b16 %v648
    %v688 = vunpack.c.l.b16 %v649
    %v689 = vunpack.c.l.b16 %v650
    %v690 = vunpack.c.l.b16 %v651
    %v691 = vunpack.c.l.b16 %v652
    %v692 = vpack.c.b16 %v677, %v676
    %v693 = vpack.c.b16 %v679, %v678
    %v694 = vpack.c.b16 %v681, %v680
    %v695 = vpack.c.b16 %v683, %v682
    %v696 = vpack.c.b16 %v685, %v684
    %v697 = vpack.c.b16 %v687, %v686
    %v698 = vpack.c.b16 %v689, %v688
    %v699 = vpack.c.b16 %v691, %v690
    %708 = vmatprep.subr.bf16.mxu0 0
    %709 = vmatpush1.bf16.msra.mxu0 %v692
    %710 = vmatprep.subr.bf16.mxu0 0
    %711 = vmatpush1.bf16.msra.mxu0 %v693
    %712 = vmatprep.subr.bf16.mxu0 0
    %713 = vmatpush1.bf16.msra.mxu0 %v694
    %714 = vmatprep.subr.bf16.mxu0 0
    %715 = vmatpush1.bf16.msra.mxu0 %v695
    %716 = vmatprep.subr.bf16.mxu0 0
    %717 = vmatpush1.bf16.msra.mxu0 %v696
    %718 = vmatprep.subr.bf16.mxu0 0
    %719 = vmatpush1.bf16.msra.mxu0 %v697
    %720 = vmatprep.subr.bf16.mxu0 0
    %721 = vmatpush1.bf16.msra.mxu0 %v698
    %722 = vmatprep.subr.bf16.mxu0 0
    %723 = vmatpush1.bf16.msra.mxu0 %v699
    %724 = vmatprep.subr.bf16.mxu0 0
    %725 = vmatpush1.bf16.msra.mxu0 0
    %726 = vmatprep.subr.bf16.mxu0 0
    %727 = vmatpush1.bf16.msra.mxu0 0
    %728 = vmatprep.subr.bf16.mxu0 0
    %729 = vmatpush1.bf16.msra.mxu0 0
    %730 = vmatprep.subr.bf16.mxu0 0
    %731 = vmatpush1.bf16.msra.mxu0 0
    %732 = vmatprep.subr.bf16.mxu0 0
    %733 = vmatpush1.bf16.msra.mxu0 0
    %734 = vmatprep.subr.bf16.mxu0 0
    %735 = vmatpush1.bf16.msra.mxu0 0
    %736 = vmatprep.subr.bf16.mxu0 0
    %737 = vmatpush1.bf16.msra.mxu0 0
    %738 = vmatprep.subr.bf16.mxu0 0
    %739 = vmatpush1.bf16.msra.mxu0 0
    %740 = vmatprep.mubr.bf16.mxu0 0
    %741 = vmatmul.mubr.bf16.gmra.mrb[0].mxu0 %v636
    %v742 = vpop.f32.mrb[0].mxu0
    %v743 = vadd.f32 %v658, %v742
    %v744 = vpop.f32.mrb[0].mxu0
    %v745 = vpop.f32.mrb[0].mxu0
    %v746 = vpop.f32.mrb[0].mxu0
    %747 = vdwg.mxu0
    %v748 = vmax.f32 %v743, 0.0
    %v749 = vpack.c.bf16 %v748, %v748
    %v750 = vld [vmem:[#allocation8] sm:$0xf]
    %v751 = vld [vmem:[#allocation8 + $0x4] sm:$0xf]
    %v752 = vld [vmem:[#allocation8 + $0x8] sm:$0xf]
    %v753 = vld [vmem:[#allocation8 + $0xc] sm:$0xf]
    %v754 = vld [vmem:[#allocation8 + $0x10] sm:$0xf]
    %v755 = vld [vmem:[#allocation8 + $0x14] sm:$0xf]
    %v756 = vld [vmem:[#allocation8 + $0x18] sm:$0xf]
    %v757 = vld [vmem:[#allocation8 + $0x1c] sm:$0xf]
    %v758 = vld [vmem:[#allocation8 + $0x20] sm:$0xf]
    %v759 = vld [vmem:[#allocation8 + $0x24] sm:$0xf]
    %v760 = vld [vmem:[#allocation8 + $0x28] sm:$0xf]
    %v761 = vld [vmem:[#allocation8 + $0x2c] sm:$0xf]
    %v762 = vld [vmem:[#allocation8 + $0x30] sm:$0xf]
    %v763 = vld [vmem:[#allocation8 + $0x34] sm:$0xf]
    %v764 = vld [vmem:[#allocation8 + $0x38] sm:$0xf]
    %v765 = vld [vmem:[#allocation8 + $0x3c] sm:$0xf]
    %v766 = vld [vmem:[%s6] sm:$0x1]
    %v768 = vlaneseq
    %v769 = vshrl.u32 %v768, 7
    %v770 = vsub.s32 0, %v769
    %v771 = vrot.slane %v766, %v770
    %v789 = vunpack.c.l.b16 %v750
    %v790 = vunpack.c.l.b16 %v751
    %v791 = vunpack.c.l.b16 %v752
    %v792 = vunpack.c.l.b16 %v753
    %v793 = vunpack.c.l.b16 %v754
    %v794 = vunpack.c.l.b16 %v755
    %v795 = vunpack.c.l.b16 %v756
    %v796 = vunpack.c.l.b16 %v757
    %v797 = vunpack.c.l.b16 %v758
    %v798 = vunpack.c.l.b16 %v759
    %v799 = vunpack.c.l.b16 %v760
    %v800 = vunpack.c.l.b16 %v761
    %v801 = vunpack.c.l.b16 %v762
    %v802 = vunpack.c.l.b16 %v763
    %v803 = vunpack.c.l.b16 %v764
    %v804 = vunpack.c.l.b16 %v765
    %v805 = vpack.c.b16 %v790, %v789
    %v806 = vpack.c.b16 %v792, %v791
    %v807 = vpack.c.b16 %v794, %v793
    %v808 = vpack.c.b16 %v796, %v795
    %v809 = vpack.c.b16 %v798, %v797
    %v810 = vpack.c.b16 %v800, %v799
    %v811 = vpack.c.b16 %v802, %v801
    %v812 = vpack.c.b16 %v804, %v803
    %821 = vmatprep.subr.bf16.mxu0 0
    %822 = vmatpush1.bf16.msra.mxu0 %v805
    %823 = vmatprep.subr.bf16.mxu0 0
    %824 = vmatpush1.bf16.msra.mxu0 %v806
    %825 = vmatprep.subr.bf16.mxu0 0
    %826 = vmatpush1.bf16.msra.mxu0 %v807
    %827 = vmatprep.subr.bf16.mxu0 0
    %828 = vmatpush1.bf16.msra.mxu0 %v808
    %829 = vmatprep.subr.bf16.mxu0 0
    %830 = vmatpush1.bf16.msra.mxu0 %v809
    %831 = vmatprep.subr.bf16.mxu0 0
    %832 = vmatpush1.bf16.msra.mxu0 %v810
    %833 = vmatprep.subr.bf16.mxu0 0
    %834 = vmatpush1.bf16.msra.mxu0 %v811
    %835 = vmatprep.subr.bf16.mxu0 0
    %836 = vmatpush1.bf16.msra.mxu0 %v812
    %837 = vmatprep.subr.bf16.mxu0 0
    %838 = vmatpush1.bf16.msra.mxu0 0
    %839 = vmatprep.subr.bf16.mxu0 0
    %840 = vmatpush1.bf16.msra.mxu0 0
    %841 = vmatprep.subr.bf16.mxu0 0
    %842 = vmatpush1.bf16.msra.mxu0 0
    %843 = vmatprep.subr.bf16.mxu0 0
    %844 = vmatpush1.bf16.msra.mxu0 0
    %845 = vmatprep.subr.bf16.mxu0 0
    %846 = vmatpush1.bf16.msra.mxu0 0
    %847 = vmatprep.subr.bf16.mxu0 0
    %848 = vmatpush1.bf16.msra.mxu0 0
    %849 = vmatprep.subr.bf16.mxu0 0
    %850 = vmatpush1.bf16.msra.mxu0 0
    %851 = vmatprep.subr.bf16.mxu0 0
    %852 = vmatpush1.bf16.msra.mxu0 0
    %853 = vmatprep.mubr.bf16.mxu0 0
    %854 = vmatmul.mubr.bf16.gmra.mrb[0].mxu0 %v749
    %v855 = vpop.f32.mrb[0].mxu0
    %v856 = vadd.f32 %v771, %v855
    %v857 = vpop.f32.mrb[0].mxu0
    %v858 = vpop.f32.mrb[0].mxu0
    %v859 = vpop.f32.mrb[0].mxu0
    %860 = vdwg.mxu0
    %v861 = vmax.f32 %v856, 0.0
    %v862 = vpack.c.bf16 %v861, %v861
    %v863 = vld [vmem:[#allocation10] sm:$0xf]
    %v864 = vld [vmem:[#allocation10 + $0x4] sm:$0xf]
    %v865 = vld [vmem:[#allocation10 + $0x8] sm:$0xf]
    %v866 = vld [vmem:[#allocation10 + $0xc] sm:$0xf]
    %v867 = vld [vmem:[#allocation10 + $0x10] sm:$0xf]
    %v868 = vld [vmem:[#allocation10 + $0x14] sm:$0xf]
    %v869 = vld [vmem:[#allocation10 + $0x18] sm:$0xf]
    %v870 = vld [vmem:[#allocation10 + $0x1c] sm:$0xf]
    %v871 = vld [vmem:[#allocation10 + $0x20] sm:$0xf]
    %v872 = vld [vmem:[#allocation10 + $0x24] sm:$0xf]
    %v873 = vld [vmem:[#allocation10 + $0x28] sm:$0xf]
    %v874 = vld [vmem:[#allocation10 + $0x2c] sm:$0xf]
    %v875 = vld [vmem:[#allocation10 + $0x30] sm:$0xf]
    %v876 = vld [vmem:[#allocation10 + $0x34] sm:$0xf]
    %v877 = vld [vmem:[#allocation10 + $0x38] sm:$0xf]
    %v878 = vld [vmem:[#allocation10 + $0x3c] sm:$0xf]
    %v879 = vld [vmem:[%s8] sm:$0x1]
    %v881 = vlaneseq
    %v882 = vshrl.u32 %v881, 7
    %v883 = vsub.s32 0, %v882
    %v884 = vrot.slane %v879, %v883
    %v902 = vunpack.c.l.b16 %v863
    %v903 = vunpack.c.l.b16 %v864
    %v904 = vunpack.c.l.b16 %v865
    %v905 = vunpack.c.l.b16 %v866
    %v906 = vunpack.c.l.b16 %v867
    %v907 = vunpack.c.l.b16 %v868
    %v908 = vunpack.c.l.b16 %v869
    %v909 = vunpack.c.l.b16 %v870
    %v910 = vunpack.c.l.b16 %v871
    %v911 = vunpack.c.l.b16 %v872
    %v912 = vunpack.c.l.b16 %v873
    %v913 = vunpack.c.l.b16 %v874
    %v914 = vunpack.c.l.b16 %v875
    %v915 = vunpack.c.l.b16 %v876
    %v916 = vunpack.c.l.b16 %v877
    %v917 = vunpack.c.l.b16 %v878
    %v918 = vpack.c.b16 %v903, %v902
    %v919 = vpack.c.b16 %v905, %v904
    %v920 = vpack.c.b16 %v907, %v906
    %v921 = vpack.c.b16 %v909, %v908
    %v922 = vpack.c.b16 %v911, %v910
    %v923 = vpack.c.b16 %v913, %v912
    %v924 = vpack.c.b16 %v915, %v914
    %v925 = vpack.c.b16 %v917, %v916
    %934 = vmatprep.subr.bf16.mxu0 0
    %935 = vmatpush1.bf16.msra.mxu0 %v918
    %936 = vmatprep.subr.bf16.mxu0 0
    %937 = vmatpush1.bf16.msra.mxu0 %v919
    %938 = vmatprep.subr.bf16.mxu0 0
    %939 = vmatpush1.bf16.msra.mxu0 %v920
    %940 = vmatprep.subr.bf16.mxu0 0
    %941 = vmatpush1.bf16.msra.mxu0 %v921
    %942 = vmatprep.subr.bf16.mxu0 0
    %943 = vmatpush1.bf16.msra.mxu0 %v922
    %944 = vmatprep.subr.bf16.mxu0 0
    %945 = vmatpush1.bf16.msra.mxu0 %v923
    %946 = vmatprep.subr.bf16.mxu0 0
    %947 = vmatpush1.bf16.msra.mxu0 %v924
    %948 = vmatprep.subr.bf16.mxu0 0
    %949 = vmatpush1.bf16.msra.mxu0 %v925
    %950 = vmatprep.subr.bf16.mxu0 0
    %951 = vmatpush1.bf16.msra.mxu0 0
    %952 = vmatprep.subr.bf16.mxu0 0
    %953 = vmatpush1.bf16.msra.mxu0 0
    %954 = vmatprep.subr.bf16.mxu0 0
    %955 = vmatpush1.bf16.msra.mxu0 0
    %956 = vmatprep.subr.bf16.mxu0 0
    %957 = vmatpush1.bf16.msra.mxu0 0
    %958 = vmatprep.subr.bf16.mxu0 0
    %959 = vmatpush1.bf16.msra.mxu0 0
    %960 = vmatprep.subr.bf16.mxu0 0
    %961 = vmatpush1.bf16.msra.mxu0 0
    %962 = vmatprep.subr.bf16.mxu0 0
    %963 = vmatpush1.bf16.msra.mxu0 0
    %964 = vmatprep.subr.bf16.mxu0 0
    %965 = vmatpush1.bf16.msra.mxu0 0
    %966 = vmatprep.mubr.bf16.mxu0 0
    %967 = vmatmul.mubr.bf16.gmra.mrb[0].mxu0 %v862
    %v968 = vpop.f32.mrb[0].mxu0
    %v969 = vadd.f32 %v884, %v968
    %v970 = vpop.f32.mrb[0].mxu0
    %v971 = vpop.f32.mrb[0].mxu0
    %v972 = vpop.f32.mrb[0].mxu0
    %973 = vdwg.mxu0
    %974 = vst [vmem:[#allocation11] sm:$0xff] %v969
    // Predicated region
    $region58: #{tpu_custom_call.1} parent=1 // pred_check
      _
    $region59: #{tpu_custom_call.1} parent=1 // pred_check_branch
      %976 = sbr.rel (0) target = $region61
    $region60: #{tpu_custom_call.1} parent=1 // pred_region
      %s978 = ssub.s32 128, 128
      %979 = vsyncadd [#allocation4], %s978
      %s981 = sshll.u32 [#allocation11], 4
      %s982 = int_to_ptr.vmem [resolvable:$true] %s981
      %984 = dma.vmem_to_hbm [thread:$0]  %s982, 128, %s9, [#allocation4]
    $region61: #{tpu_custom_call.1} parent=1 // pred_fallthru
      _
    // Predicated region
    $region62: #{tpu_custom_call.1} parent=1 // pred_check
      _
    $region63: #{tpu_custom_call.1} parent=1 // pred_check_branch
      %986 = sbr.rel (0) target = $region65
    $region64: #{tpu_custom_call.1} parent=1 // pred_region
      %987 = dma.done [#allocation4], 128
    $region65: #{tpu_custom_call.1} parent=1 // pred_fallthru
      _
    %988 = vsyncpa [#allocation3], 1
    %989 = vsyncpa [#allocation6], 1
    %990 = vsyncpa [#allocation9], 1
    %991 = vsyncpa [#allocation4], 1

</llo_original>
